<compile_context>
chip_gen: v7x
topology: tpu7x:2x2x1
jax: 0.10.0
libtpu: 0.0.40
codegen_flags: <defaults>
</compile_context>

<pallas_src>
import functools

import jax
import jax.numpy as jnp
from jax import lax
from jax.experimental import pallas as pl
from jax.experimental.pallas import tpu as pltpu


def _activation_fn(name):
    """Mirror selectActivationFunction (unknown names fall back to ReLU)."""
    if name == "relu":
        return lambda v: jnp.maximum(v, 0.0)
    if name == "sigmoid":
        return jax.nn.sigmoid
    if name == "tanh":
        return jnp.tanh
    if name == "leaky_relu":
        return lambda v: jnp.where(v > 0, v, 0.01 * v)
    return lambda v: jnp.maximum(v, 0.0)


def _round_up(x, m):
    return ((x + m - 1) // m) * m


def _vmem_capacity_bytes():
    """Physical VMEM of the current chip (conservative fallback = v7x 64 MiB)."""
    try:
        info = pltpu.get_tpu_info()
        cap = getattr(info, "vmem_capacity_bytes", None)
        if cap:
            return int(cap)
    except Exception:
        pass
    return 64 << 20


def mlp_kernel(x_ref, w_in_ref, b_in_ref, w_h_ref, b_h_ref,
               w_out_ref, b_out_ref, o_ref, *, num_layers, d_in, act, mxu_dtype):
    """Whole MLP forward for one batch tile.

    Shapes seen by the kernel (per grid step), Hp = H padded to 128 multiple:
      x_ref     : (TB, d_in)                      streamed per step
      w_in_ref  : (d_in, Hp)    b_in_ref  : (1, Hp)       VMEM residents
      w_h_ref   : (L, Hp, Hp)   b_h_ref   : (L, 1, Hp)    VMEM residents
      w_out_ref : (Hp, d_out)   b_out_ref : (1, d_out)    VMEM residents
      o_ref     : (TB, d_out)   (unpadded output writeback)
    """
    x = x_ref[...]

    # ---- fc_in ----
    if d_in <= 8:
        # Tiny contraction dim: d_in broadcast multiplies on the VPU, summed as
        # a tree (independent VALU work), beat a near-empty K=d_in MXU pass.
        xf = x.astype(jnp.float32)
        w_in = w_in_ref[...].astype(jnp.float32)
        parts = [xf[:, j:j + 1] * w_in[j:j + 1, :] for j in range(d_in)]
        while len(parts) > 1:
            nxt = [parts[i] + parts[i + 1] for i in range(0, len(parts) - 1, 2)]
            if len(parts) % 2:
                nxt.append(parts[-1])
            parts = nxt
        h = parts[0] + b_in_ref[...].astype(jnp.float32)
    else:
        h = jnp.dot(x.astype(mxu_dtype), w_in_ref[...].astype(mxu_dtype),
                    preferred_element_type=jnp.float32)
        h = h + b_in_ref[...].astype(jnp.float32)
    h = act(h)

    # ---- hidden layers ----
    if num_layers > 0:
        if num_layers <= 8:
            b_h = b_h_ref[...].astype(jnp.float32)            # (L, 1, Hp), loaded once
            for l in range(num_layers):
                z = jnp.dot(h.astype(mxu_dtype), w_h_ref[l].astype(mxu_dtype),
                            preferred_element_type=jnp.float32)
                h = act(z + b_h[l])
        else:
            def body(l, hh):
                z = jnp.dot(hh.astype(mxu_dtype), w_h_ref[l].astype(mxu_dtype),
                            preferred_element_type=jnp.float32)
                return act(z + b_h_ref[l].astype(jnp.float32))
            h = lax.fori_loop(0, num_layers, body, h)

    # ---- fc_out (no activation); padded h lanes hit zero rows of w_out ----
    out = jnp.dot(h.astype(mxu_dtype), w_out_ref[...].astype(mxu_dtype),
                  preferred_element_type=jnp.float32)
    o_ref[...] = (out + b_out_ref[...].astype(jnp.float32)).astype(o_ref.dtype)


def mlp_forward(x, params, *, activation="relu", block_b=None):
    """Run the Pallas MLP kernel, tiling only over the batch dimension."""
    w_in, b_in, w_h, b_h, w_out, b_out = params
    B, d_in = x.shape
    L, H, _ = w_h.shape
    d_out = w_out.shape[1]
    out_dtype = x.dtype
    f32 = jnp.float32

    # MXU operand dtype: bf16 inputs stay bf16 (fast MXU path on v6e/v7x and
    # half the resident-weight VMEM); f32 inputs keep f32 to match reference.
    mxu_dtype = jnp.bfloat16 if x.dtype == jnp.bfloat16 else jnp.float32
    w_dtype = jnp.bfloat16 if mxu_dtype == jnp.bfloat16 else jnp.float32

    # --- lane-dense hidden dim: pad H up to a multiple of 128 (zeros) ---
    H_pad = max(128, _round_up(H, 128))

    def pad_to(a, shape):
        pads = [(0, t - s) for s, t in zip(a.shape, shape)]
        return jnp.pad(a, pads) if any(p[1] for p in pads) else a

    w_in_p = pad_to(w_in.astype(w_dtype), (d_in, H_pad))
    b_in_p = pad_to(b_in.astype(f32).reshape(1, H), (1, H_pad))
    L_buf = max(L, 1)
    if L > 0:
        w_h_p = pad_to(w_h.astype(w_dtype), (L, H_pad, H_pad))
        b_h_p = pad_to(b_h.astype(f32).reshape(L, 1, H), (L, 1, H_pad))
    else:
        w_h_p = jnp.zeros((1, H_pad, H_pad), w_dtype)
        b_h_p = jnp.zeros((1, 1, H_pad), f32)
    # fc_out: pad ROWS only (so padded h lanes contribute zero); keep d_out
    # unpadded so the HBM writeback is not inflated for tiny outputs.
    w_out_p = pad_to(w_out.astype(w_dtype), (H_pad, d_out))
    b_out_p = b_out.astype(f32).reshape(1, d_out)

    vmem_cap = _vmem_capacity_bytes()
    itm_w = jnp.dtype(w_dtype).itemsize
    itm_x = jnp.dtype(x.dtype).itemsize
    itm_o = jnp.dtype(out_dtype).itemsize
    weight_bytes = (itm_w * (d_in * H_pad + L_buf * H_pad * H_pad + H_pad * d_out)
                    + 4 * (H_pad + L_buf * H_pad + d_out))

    # --- batch tile ---
    sub = {4: 8, 2: 16, 1: 32}.get(itm_x, 8)      # sublane tile per I/O dtype
    if block_b is None:
        if B <= 128:
            block_b = B                            # single step; overhead-bound
        else:
            block_b = min(512, pl.cdiv(B, 2))      # >=2 steps: both v7x TCs busy
    # Keep activations + double-buffered I/O tiles within ~60% of VMEM.
    per_row = 4 * 4 * H_pad + 2 * itm_x * d_in + 2 * itm_o * d_out + 4 * d_out
    avail = int(0.6 * vmem_cap) - weight_bytes
    if avail > 0:
        block_b = min(block_b, max(sub, avail // per_row))
    block_b = max(sub, _round_up(block_b, sub))
    B_pad = _round_up(B, block_b)
    if B_pad != B:
        x = jnp.pad(x, ((0, B_pad - B), (0, 0)))

    # --- VMEM budget: single-buffered weights + double-buffered tiles + h ---
    tile_bytes = itm_x * block_b * d_in + itm_o * block_b * d_out
    act_bytes = 4 * 4 * block_b * H_pad
    vmem_need = weight_bytes + 2 * tile_bytes + act_bytes + (2 << 20)
    vmem_limit = int(min(max(vmem_need, 8 << 20), int(0.9 * vmem_cap)))

    grid = (B_pad // block_b,)
    act = _activation_fn(activation)
    kernel = functools.partial(mlp_kernel, num_layers=L, d_in=d_in,
                               act=act, mxu_dtype=mxu_dtype)

    # Untiled, single-buffered VMEM residency for the (small) weights/biases.
    vmem_full = pl.BlockSpec(memory_space=pltpu.MemorySpace.VMEM)

    flops = 2 * B_pad * (d_in * H_pad + L * H_pad * H_pad + H_pad * d_out)
    transc = B_pad * H_pad * (L + 1) if activation in ("sigmoid", "tanh") else 0
    bytes_accessed = (itm_x * B_pad * d_in + weight_bytes + itm_o * B_pad * d_out)

    out = pl.pallas_call(
        kernel,
        out_shape=jax.ShapeDtypeStruct((B_pad, d_out), out_dtype),
        grid=grid,
        in_specs=[
            pl.BlockSpec((block_b, d_in), lambda i: (i, 0)),   # x tile (streamed)
            vmem_full,                                         # w_in  (d_in, Hp)
            vmem_full,                                         # b_in  (1, Hp)
            vmem_full,                                         # w_h   (L, Hp, Hp)
            vmem_full,                                         # b_h   (L, 1, Hp)
            vmem_full,                                         # w_out (Hp, d_out)
            vmem_full,                                         # b_out (1, d_out)
        ],
        out_specs=pl.BlockSpec((block_b, d_out), lambda i: (i, 0)),
        compiler_params=pltpu.CompilerParams(
            dimension_semantics=("parallel",),
            vmem_limit_bytes=vmem_limit),
        cost_estimate=pl.CostEstimate(
            flops=int(flops),
            transcendentals=int(transc),
            bytes_accessed=int(bytes_accessed)),
    )(x, w_in_p, b_in_p, w_h_p, b_h_p, w_out_p, b_out_p)

    return out[:B] if B_pad != B else out


def init_params(key, d_in, hidden, d_out, num_layers):
    """Deterministic init mimicking kaiming_uniform_ (relu) for weights and
    PyTorch's default uniform(-1/sqrt(fan_in), 1/sqrt(fan_in)) for biases."""
    ks = jax.random.split(key, 6)

    def kaiming(k, fan_in, shape):
        bound = jnp.sqrt(6.0 / fan_in)          # gain(relu)*sqrt(3/fan_in)
        return jax.random.uniform(k, shape, jnp.float32, -bound, bound)

    def bias(k, fan_in, shape):
        bound = 1.0 / jnp.sqrt(fan_in)
        return jax.random.uniform(k, shape, jnp.float32, -bound, bound)

    # weights stored as (in, out) == PyTorch weight.T
    w_in = kaiming(ks[0], d_in, (d_in, hidden))
    b_in = bias(ks[1], d_in, (1, hidden))
    w_h = kaiming(ks[2], hidden, (num_layers, hidden, hidden))
    b_h = bias(ks[3], hidden, (num_layers, hidden))
    w_out = kaiming(ks[4], hidden, (hidden, d_out))
    b_out = bias(ks[5], hidden, (1, d_out))
    return (w_in, b_in, w_h, b_h, w_out, b_out)


def mlp_reference(x, params, activation="relu"):
    """Pure-JAX reference matching the PyTorch forward."""
    act = _activation_fn(activation)
    w_in, b_in, w_h, b_h, w_out, b_out = params
    h = act(x @ w_in + b_in)
    for l in range(w_h.shape[0]):
        h = act(h @ w_h[l] + b_h[l][None, :])
    return h @ w_out + b_out


if __name__ == "__main__":
    key = jax.random.PRNGKey(0)

    # --- Case 1: module defaults (input_dim=2, output_dim=1, H=50, L=1) ---
    D_IN, D_OUT, HIDDEN, NUM_LAYERS = 2, 1, 50, 1
    BATCH = 16
    k_x, k_p, key = jax.random.split(key, 3)
    x = jax.random.normal(k_x, (BATCH, D_IN), dtype=jnp.float32)
    params = init_params(k_p, D_IN, HIDDEN, D_OUT, NUM_LAYERS)
    out = jax.block_until_ready(mlp_forward(x, params, activation="relu"))
    ref = mlp_reference(x, params, activation="relu")
    assert out.shape == (BATCH, D_OUT)
    assert jnp.allclose(out, ref, atol=1e-5, rtol=1e-5), "mismatch vs reference (case 1)"

    # --- Case 2: wider config exercising MXU fc_in, multi-layer, multi-step grid ---
    D_IN, D_OUT, HIDDEN, NUM_LAYERS = 16, 3, 64, 2
    BATCH = 192
    k_x, k_p = jax.random.split(key)
    x2 = jax.random.normal(k_x, (BATCH, D_IN), dtype=jnp.float32)
    params2 = init_params(k_p, D_IN, HIDDEN, D_OUT, NUM_LAYERS)
    out2 = jax.block_until_ready(mlp_forward(x2, params2, activation="tanh"))
    ref2 = mlp_reference(x2, params2, activation="tanh")
    assert out2.shape == (BATCH, D_OUT)
    assert jnp.allclose(out2, ref2, atol=1e-4, rtol=1e-4), "mismatch vs reference (case 2)"

    print("KERNEL_OK")
</pallas_src>

<mosaic_0001>
module attributes {stable_mosaic.version = 11 : i64} {
  func.func @mlp_kernel(%arg0: i32, %arg1: memref<16x2xf32, #tpu.memory_space<vmem>>, %arg2: memref<2x128xf32, #tpu.memory_space<vmem>>, %arg3: memref<1x128xf32, #tpu.memory_space<vmem>>, %arg4: memref<1x128x128xf32, #tpu.memory_space<vmem>>, %arg5: memref<1x1x128xf32, #tpu.memory_space<vmem>>, %arg6: memref<128x1xf32, #tpu.memory_space<vmem>>, %arg7: memref<1x1xf32, #tpu.memory_space<vmem>>, %arg8: memref<16x1xf32, #tpu.memory_space<vmem>>) attributes {dimension_semantics = [#tpu.dimension_semantics<parallel>], iteration_bounds = array<i64: 1>, scalar_prefetch = 0 : i64, scratch_operands = 0 : i64, tpu.core_type = #tpu.core_type<tc>, window_params = [{transform_indices = @transform_0, window_bounds = array<i64: 16, 2>}, {pipeline_mode = #tpu.pipeline_mode<synchronous>, transform_indices = @transform_1, window_bounds = array<i64: 2, 128>}, {pipeline_mode = #tpu.pipeline_mode<synchronous>, transform_indices = @transform_2, window_bounds = array<i64: 1, 128>}, {pipeline_mode = #tpu.pipeline_mode<synchronous>, transform_indices = @transform_3, window_bounds = array<i64: 1, 128, 128>}, {pipeline_mode = #tpu.pipeline_mode<synchronous>, transform_indices = @transform_4, window_bounds = array<i64: 1, 1, 128>}, {pipeline_mode = #tpu.pipeline_mode<synchronous>, transform_indices = @transform_5, window_bounds = array<i64: 128, 1>}, {pipeline_mode = #tpu.pipeline_mode<synchronous>, transform_indices = @transform_6, window_bounds = array<i64: 1, 1>}, {transform_indices = @transform_7, window_bounds = array<i64: 16, 1>}]} {
    %c0 = arith.constant 0 : index
    %c0_0 = arith.constant 0 : index
    %0 = vector.load %arg1[%c0, %c0_0] : memref<16x2xf32, #tpu.memory_space<vmem>>, vector<16x2xf32>
    %c0_1 = arith.constant 0 : index
    %c0_2 = arith.constant 0 : index
    %1 = vector.load %arg2[%c0_1, %c0_2] : memref<2x128xf32, #tpu.memory_space<vmem>>, vector<2x128xf32>
    %2 = vector.extract_strided_slice %0 {offsets = [0, 0], sizes = [16, 1], strides = [1, 1]} : vector<16x2xf32> to vector<16x1xf32>
    %3 = vector.extract_strided_slice %1 {offsets = [0, 0], sizes = [1, 128], strides = [1, 1]} : vector<2x128xf32> to vector<1x128xf32>
    %4 = vector.broadcast %2 : vector<16x1xf32> to vector<16x128xf32>
    %5 = vector.broadcast %3 : vector<1x128xf32> to vector<16x128xf32>
    %6 = arith.mulf %4, %5 : vector<16x128xf32>
    %7 = vector.extract_strided_slice %0 {offsets = [0, 1], sizes = [16, 1], strides = [1, 1]} : vector<16x2xf32> to vector<16x1xf32>
    %8 = vector.extract_strided_slice %1 {offsets = [1, 0], sizes = [1, 128], strides = [1, 1]} : vector<2x128xf32> to vector<1x128xf32>
    %9 = vector.broadcast %7 : vector<16x1xf32> to vector<16x128xf32>
    %10 = vector.broadcast %8 : vector<1x128xf32> to vector<16x128xf32>
    %11 = arith.mulf %9, %10 : vector<16x128xf32>
    %12 = arith.addf %6, %11 : vector<16x128xf32>
    %c0_3 = arith.constant 0 : index
    %c0_4 = arith.constant 0 : index
    %13 = vector.load %arg3[%c0_3, %c0_4] : memref<1x128xf32, #tpu.memory_space<vmem>>, vector<1x128xf32>
    %14 = vector.broadcast %13 : vector<1x128xf32> to vector<16x128xf32>
    %15 = arith.addf %12, %14 : vector<16x128xf32>
    %cst = arith.constant 0.000000e+00 : f32
    %16 = vector.broadcast %cst : f32 to vector<16x128xf32>
    %17 = arith.maximumf %15, %16 : vector<16x128xf32>
    %c0_5 = arith.constant 0 : index
    %c0_6 = arith.constant 0 : index
    %c0_7 = arith.constant 0 : index
    %18 = vector.load %arg5[%c0_5, %c0_6, %c0_7] : memref<1x1x128xf32, #tpu.memory_space<vmem>>, vector<1x1x128xf32>
    %c0_8 = arith.constant 0 : index
    %c0_9 = arith.constant 0 : index
    %c0_10 = arith.constant 0 : index
    %19 = vector.load %arg4[%c0_8, %c0_9, %c0_10] : memref<1x128x128xf32, #tpu.memory_space<vmem>>, vector<1x128x128xf32>
    %20 = vector.shape_cast %19 : vector<1x128x128xf32> to vector<128x128xf32>
    %cst_11 = arith.constant dense<0.000000e+00> : vector<16x128xf32>
    %21 = tpu.matmul %17, %20, %cst_11 {dimension_numbers = #tpu.dot_dimension_numbers<[1], [0], [0], [1], [0, 0, 1, 1], [], []>} : vector<16x128xf32>, vector<128x128xf32>, vector<16x128xf32> -> vector<16x128xf32>
    %22 = vector.shape_cast %18 : vector<1x1x128xf32> to vector<1x128xf32>
    %23 = vector.broadcast %22 : vector<1x128xf32> to vector<16x128xf32>
    %24 = arith.addf %21, %23 : vector<16x128xf32>
    %cst_12 = arith.constant 0.000000e+00 : f32
    %25 = vector.broadcast %cst_12 : f32 to vector<16x128xf32>
    %26 = arith.maximumf %24, %25 : vector<16x128xf32>
    %c0_13 = arith.constant 0 : index
    %c0_14 = arith.constant 0 : index
    %27 = vector.load %arg6[%c0_13, %c0_14] : memref<128x1xf32, #tpu.memory_space<vmem>>, vector<128x1xf32>
    %cst_15 = arith.constant dense<0.000000e+00> : vector<16x1xf32>
    %28 = tpu.matmul %26, %27, %cst_15 {dimension_numbers = #tpu.dot_dimension_numbers<[1], [0], [0], [1], [0, 0, 1, 1], [], []>} : vector<16x128xf32>, vector<128x1xf32>, vector<16x1xf32> -> vector<16x1xf32>
    %c0_16 = arith.constant 0 : index
    %c0_17 = arith.constant 0 : index
    %29 = vector.load %arg7[%c0_16, %c0_17] : memref<1x1xf32, #tpu.memory_space<vmem>>, vector<1x1xf32>
    %30 = vector.broadcast %29 : vector<1x1xf32> to vector<16x1xf32>
    %31 = arith.addf %28, %30 : vector<16x1xf32>
    %c0_18 = arith.constant 0 : index
    %c0_19 = arith.constant 0 : index
    %32 = vector.load %arg8[%c0_18, %c0_19] : memref<16x1xf32, #tpu.memory_space<vmem>>, vector<16x1xf32>
    tpu.vector_store %arg8[%c0_18, %c0_19], %31 {strides = array<i32>} : memref<16x1xf32, #tpu.memory_space<vmem>>, vector<16x1xf32>,
    return
  }
  func.func @transform_0(%arg0: i32) -> (i32, i32) {
    %c0_i32 = arith.constant 0 : i32
    %c0_i32_0 = arith.constant 0 : i32
    return %arg0, %c0_i32 : i32, i32
  }
  func.func @transform_1(%arg0: i32) -> (i32, i32) {
    %c0_i32 = arith.constant 0 : i32
    %c0_i32_0 = arith.constant 0 : i32
    %c0_i32_1 = arith.constant 0 : i32
    return %c0_i32, %c0_i32_0 : i32, i32
  }
  func.func @transform_2(%arg0: i32) -> (i32, i32) {
    %c0_i32 = arith.constant 0 : i32
    %c0_i32_0 = arith.constant 0 : i32
    %c0_i32_1 = arith.constant 0 : i32
    return %c0_i32, %c0_i32_0 : i32, i32
  }
  func.func @transform_3(%arg0: i32) -> (i32, i32, i32) {
    %c0_i32 = arith.constant 0 : i32
    %c0_i32_0 = arith.constant 0 : i32
    %c0_i32_1 = arith.constant 0 : i32
    %c0_i32_2 = arith.constant 0 : i32
    return %c0_i32, %c0_i32_0, %c0_i32_1 : i32, i32, i32
  }
  func.func @transform_4(%arg0: i32) -> (i32, i32, i32) {
    %c0_i32 = arith.constant 0 : i32
    %c0_i32_0 = arith.constant 0 : i32
    %c0_i32_1 = arith.constant 0 : i32
    %c0_i32_2 = arith.constant 0 : i32
    return %c0_i32, %c0_i32_0, %c0_i32_1 : i32, i32, i32
  }
  func.func @transform_5(%arg0: i32) -> (i32, i32) {
    %c0_i32 = arith.constant 0 : i32
    %c0_i32_0 = arith.constant 0 : i32
    %c0_i32_1 = arith.constant 0 : i32
    return %c0_i32, %c0_i32_0 : i32, i32
  }
  func.func @transform_6(%arg0: i32) -> (i32, i32) {
    %c0_i32 = arith.constant 0 : i32
    %c0_i32_0 = arith.constant 0 : i32
    %c0_i32_1 = arith.constant 0 : i32
    return %c0_i32, %c0_i32_0 : i32, i32
  }
  func.func @transform_7(%arg0: i32) -> (i32, i32) {
    %c0_i32 = arith.constant 0 : i32
    %c0_i32_0 = arith.constant 0 : i32
    return %arg0, %c0_i32 : i32, i32
  }
}

</mosaic_0001>

<llo_original>
// kernel: tpu_custom_call.1
$region0: #{tpu_custom_call.1}
  #allocation0 [shape = 'u32[]', space=smem, size = 0x4, offset = 0x4, fixed_abs, tag = 'smem constant byte address 0x4 - core index']
  #allocation1 [shape = 'u32[144,128]{1,0:T(1,128)}', space=vmem, size = 0x12000, scoped, tag = 'internal scratch']
  #allocation2 [shape = 'f32[1,1]{1,0:T(1,128)S(1)}', space=vmem, size = 0x200, scoped, tag = 'scoped memory for tpu_custom_call.1']
  %s0 = inlined_call_operand.vmem [shape: f32[16,2], index: 0, kind: input, shape index: {}]
  %s1 = inlined_call_operand.vmem [shape: f32[2,128], index: 1, kind: input, shape index: {}]
  %s2 = inlined_call_operand.vmem [shape: f32[1,128], index: 2, kind: input, shape index: {}]
  %s3 = inlined_call_operand.vmem [shape: f32[1,128,128], index: 3, kind: input, shape index: {}]
  %s4 = inlined_call_operand.vmem [shape: f32[1,1,128], index: 4, kind: input, shape index: {}]
  %s5 = inlined_call_operand.vmem [shape: f32[128,1], index: 5, kind: input, shape index: {}]
  %s6 = inlined_call_operand.<no memory space> [shape: f32[1,1], index: 6, kind: input, shape index: {}]
  %s7 = inlined_call_operand.vmem [shape: f32[16,1], index: 7, kind: output, shape index: {}]
  %s8 = sld [smem:[#allocation0]]
  $region38: #{tpu_custom_call.1} parent=0
    _
  %s10 = ssub.s32 1, %s8
  %s11 = scalar_select 0, %s10, %s8
  %v12 = vstv %s6
  %13 = vst [vmem:[#allocation2] sm:$0x1] %v12
  // Predicated region
  $region2: #{tpu_custom_call.1} parent=0 // pred_check
    _
  $region3: #{tpu_custom_call.1} parent=0 // pred_check_branch
    %15 = sbr.rel (0) target = $region5
  $region4: #{tpu_custom_call.1} parent=0 // pred_region
    _
  $region5: #{tpu_custom_call.1} parent=0 // pred_fallthru
    _
  // Predicated region
  $region6: #{tpu_custom_call.1} parent=0 // pred_check
    _
  $region7: #{tpu_custom_call.1} parent=0 // pred_check_branch
    %17 = sbr.rel (0) target = $region9
  $region8: #{tpu_custom_call.1} parent=0 // pred_region
    _
  $region9: #{tpu_custom_call.1} parent=0 // pred_fallthru
    _
  // Predicated region
  $region10: #{tpu_custom_call.1} parent=0 // pred_check
    _
  $region11: #{tpu_custom_call.1} parent=0 // pred_check_branch
    %19 = sbr.rel (0) target = $region13
  $region12: #{tpu_custom_call.1} parent=0 // pred_region
    _
  $region13: #{tpu_custom_call.1} parent=0 // pred_fallthru
    _
  // Predicated region
  $region14: #{tpu_custom_call.1} parent=0 // pred_check
    _
  $region15: #{tpu_custom_call.1} parent=0 // pred_check_branch
    %21 = sbr.rel (0) target = $region17
  $region16: #{tpu_custom_call.1} parent=0 // pred_region
    _
  $region17: #{tpu_custom_call.1} parent=0 // pred_fallthru
    _
  // Predicated region
  $region18: #{tpu_custom_call.1} parent=0 // pred_check
    _
  $region19: #{tpu_custom_call.1} parent=0 // pred_check_branch
    %23 = sbr.rel (0) target = $region21
  $region20: #{tpu_custom_call.1} parent=0 // pred_region
    _
  $region21: #{tpu_custom_call.1} parent=0 // pred_fallthru
    _
  // Predicated region
  $region22: #{tpu_custom_call.1} parent=0 // pred_check
    _
  $region23: #{tpu_custom_call.1} parent=0 // pred_check_branch
    %25 = sbr.rel (0) target = $region25
  $region24: #{tpu_custom_call.1} parent=0 // pred_region
    _
  $region25: #{tpu_custom_call.1} parent=0 // pred_fallthru
    _
  // Predicated region
  $region26: #{tpu_custom_call.1} parent=0 // pred_check
    _
  $region27: #{tpu_custom_call.1} parent=0 // pred_check_branch
    %27 = sbr.rel (0) target = $region29
  $region28: #{tpu_custom_call.1} parent=0 // pred_region
    _
  $region29: #{tpu_custom_call.1} parent=0 // pred_fallthru
    _
  %v28 = vld [vmem:[%s0] sm:$0xff]
  %v29 = vld [vmem:[%s0 + $0x8] sm:$0xff]
  %v30 = vld [vmem:[%s1] sm:$0x3]
  %32 = vset.pattern.permute.xlu0 0
  %33 = vperm.xlu0 %32, %v28
  %v34 = vpop.permute.xlu0 %33
  %37 = vset.pattern.permute.xlu0 0
  %38 = vperm.xlu0 %37, %v29
  %v39 = vpop.permute.xlu0 %38
  %v41 = vlaneseq
  %v42 = vshrl.u32 %v41, 7
  %v43 = vsub.s32 0, %v42
  %v44 = vrot.slane %v30, %v43
  %v45 = vmul.f32 %v34, %v44
  %v46 = vmul.f32 %v39, %v44
  %47 = vset.pattern.permute.xlu0 1
  %48 = vperm.xlu0 %47, %v28
  %v49 = vpop.permute.xlu0 %48
  %51 = vset.pattern.permute.xlu0 1
  %52 = vperm.xlu0 %51, %v29
  %v53 = vpop.permute.xlu0 %52
  %v55 = vlaneseq
  %v56 = vshrl.u32 %v55, 7
  %v57 = vsub.s32 1, %v56
  %v58 = vrot.slane %v30, %v57
  %v59 = vmul.f32 %v49, %v58
  %v60 = vmul.f32 %v53, %v58
  %v61 = vadd.f32 %v45, %v59
  %v62 = vadd.f32 %v46, %v60
  %v63 = vld [vmem:[%s2] sm:$0x1]
  %v65 = vlaneseq
  %v66 = vshrl.u32 %v65, 7
  %v67 = vsub.s32 0, %v66
  %v68 = vrot.slane %v63, %v67
  %v70 = vadd.f32 %v61, %v68
  %v71 = vadd.f32 %v62, %v68
  %v72 = vmax.f32 %v70, 0.0
  %v73 = vmax.f32 %v71, 0.0
  %v74 = vld [vmem:[%s4] sm:$0x1]
  %v75 = vld [vmem:[%s3] sm:$0xff]
  %v76 = vld [vmem:[%s3 + $0x8] sm:$0xff]
  %v77 = vld [vmem:[%s3 + $0x10] sm:$0xff]
  %v78 = vld [vmem:[%s3 + $0x18] sm:$0xff]
  %v79 = vld [vmem:[%s3 + $0x20] sm:$0xff]
  %v80 = vld [vmem:[%s3 + $0x28] sm:$0xff]
  %v81 = vld [vmem:[%s3 + $0x30] sm:$0xff]
  %v82 = vld [vmem:[%s3 + $0x38] sm:$0xff]
  %v83 = vld [vmem:[%s3 + $0x40] sm:$0xff]
  %v84 = vld [vmem:[%s3 + $0x48] sm:$0xff]
  %v85 = vld [vmem:[%s3 + $0x50] sm:$0xff]
  %v86 = vld [vmem:[%s3 + $0x58] sm:$0xff]
  %v87 = vld [vmem:[%s3 + $0x60] sm:$0xff]
  %v88 = vld [vmem:[%s3 + $0x68] sm:$0xff]
  %v89 = vld [vmem:[%s3 + $0x70] sm:$0xff]
  %v90 = vld [vmem:[%s3 + $0x78] sm:$0xff]
  %v92 = vlaneseq
  %v93 = vshrl.u32 %v92, 7
  %v94 = vsub.s32 0, %v93
  %v95 = vrot.slane %v74, %v94
  %97 = vmatprep.subr.mxu0 0.0
  %98 = vmatpush1.msra.mxu0 %v75
  %99 = vmatprep.subr.mxu0 0.0
  %100 = vmatpush1.msra.mxu0 %v76
  %101 = vmatprep.subr.mxu0 0.0
  %102 = vmatpush1.msra.mxu0 %v77
  %103 = vmatprep.subr.mxu0 0.0
  %104 = vmatpush1.msra.mxu0 %v78
  %105 = vmatprep.subr.mxu0 0.0
  %106 = vmatpush1.msra.mxu0 %v79
  %107 = vmatprep.subr.mxu0 0.0
  %108 = vmatpush1.msra.mxu0 %v80
  %109 = vmatprep.subr.mxu0 0.0
  %110 = vmatpush1.msra.mxu0 %v81
  %111 = vmatprep.subr.mxu0 0.0
  %112 = vmatpush1.msra.mxu0 %v82
  %113 = vmatprep.subr.mxu0 0.0
  %114 = vmatpush1.msra.mxu0 %v83
  %115 = vmatprep.subr.mxu0 0.0
  %116 = vmatpush1.msra.mxu0 %v84
  %117 = vmatprep.subr.mxu0 0.0
  %118 = vmatpush1.msra.mxu0 %v85
  %119 = vmatprep.subr.mxu0 0.0
  %120 = vmatpush1.msra.mxu0 %v86
  %121 = vmatprep.subr.mxu0 0.0
  %122 = vmatpush1.msra.mxu0 %v87
  %123 = vmatprep.subr.mxu0 0.0
  %124 = vmatpush1.msra.mxu0 %v88
  %125 = vmatprep.subr.mxu0 0.0
  %126 = vmatpush1.msra.mxu0 %v89
  %127 = vmatprep.subr.mxu0 0.0
  %128 = vmatpush1.msra.mxu0 %v90
  %129 = vmatprep.subr.mxu0 0.0
  %130 = vmatpush1.msra.mxu0 0.0
  %131 = vmatprep.subr.mxu0 0.0
  %132 = vmatpush1.msra.mxu0 0.0
  %133 = vmatprep.subr.mxu0 0.0
  %134 = vmatpush1.msra.mxu0 0.0
  %135 = vmatprep.subr.mxu0 0.0
  %136 = vmatpush1.msra.mxu0 0.0
  %137 = vmatprep.subr.mxu0 0.0
  %138 = vmatpush1.msra.mxu0 0.0
  %139 = vmatprep.subr.mxu0 0.0
  %140 = vmatpush1.msra.mxu0 0.0
  %141 = vmatprep.subr.mxu0 0.0
  %142 = vmatpush1.msra.mxu0 0.0
  %143 = vmatprep.subr.mxu0 0.0
  %144 = vmatpush1.msra.mxu0 0.0
  %145 = vmatprep.subr.mxu0 0.0
  %146 = vmatpush1.msra.mxu0 0.0
  %147 = vmatprep.subr.mxu0 0.0
  %148 = vmatpush1.msra.mxu0 0.0
  %149 = vmatprep.subr.mxu0 0.0
  %150 = vmatpush1.msra.mxu0 0.0
  %151 = vmatprep.subr.mxu0 0.0
  %152 = vmatpush1.msra.mxu0 0.0
  %153 = vmatprep.subr.mxu0 0.0
  %154 = vmatpush1.msra.mxu0 0.0
  %155 = vmatprep.subr.mxu0 0.0
  %156 = vmatpush1.msra.mxu0 0.0
  %157 = vmatprep.subr.mxu0 0.0
  %158 = vmatpush1.msra.mxu0 0.0
  %159 = vmatprep.subr.mxu0 0.0
  %160 = vmatpush1.msra.mxu0 0.0
  %161 = vmatprep.mubr.f32.mxu0 0.0
  %162 = vmatmul.mubr.f32.gmra.mrb[0].mxu0 %v72
  %v163 = vpop.f32.mrb[0].mxu0
  %v164 = vadd.f32 %v95, %v163
  %v165 = vpop.f32.mrb[0].mxu0
  %166 = vmatprep.mubr.f32.mxu0 0.0
  %167 = vmatmul.mubr.f32.gmra.mrb[0].mxu0 %v73
  %v168 = vpop.f32.mrb[0].mxu0
  %v169 = vadd.f32 %v95, %v168
  %v170 = vpop.f32.mrb[0].mxu0
  %171 = vdwg.mxu0
  %v172 = vmax.f32 %v164, 0.0
  %v173 = vmax.f32 %v169, 0.0
  %v174 = vld [vmem:[%s5] sm:$0xff]
  %v175 = vld [vmem:[%s5 + $0x8] sm:$0xff]
  %v176 = vld [vmem:[%s5 + $0x10] sm:$0xff]
  %v177 = vld [vmem:[%s5 + $0x18] sm:$0xff]
  %v178 = vld [vmem:[%s5 + $0x20] sm:$0xff]
  %v179 = vld [vmem:[%s5 + $0x28] sm:$0xff]
  %v180 = vld [vmem:[%s5 + $0x30] sm:$0xff]
  %v181 = vld [vmem:[%s5 + $0x38] sm:$0xff]
  %v182 = vld [vmem:[%s5 + $0x40] sm:$0xff]
  %v183 = vld [vmem:[%s5 + $0x48] sm:$0xff]
  %v184 = vld [vmem:[%s5 + $0x50] sm:$0xff]
  %v185 = vld [vmem:[%s5 + $0x58] sm:$0xff]
  %v186 = vld [vmem:[%s5 + $0x60] sm:$0xff]
  %v187 = vld [vmem:[%s5 + $0x68] sm:$0xff]
  %v188 = vld [vmem:[%s5 + $0x70] sm:$0xff]
  %v189 = vld [vmem:[%s5 + $0x78] sm:$0xff]
  %v190 = vld [vmem:[#allocation2] sm:$0x1]
  %v192 = vlaneseq
  %v193 = vshrl.u32 %v192, 7
  %v194 = vsub.s32 0, %v193
  %v195 = vrot.slane %v190, %v194
  %197 = vmatprep.subr.mxu0 0.0
  %198 = vmatpush1.msra.mxu0 %v174
  %199 = vmatprep.subr.mxu0 0.0
  %200 = vmatpush1.msra.mxu0 %v175
  %201 = vmatprep.subr.mxu0 0.0
  %202 = vmatpush1.msra.mxu0 %v176
  %203 = vmatprep.subr.mxu0 0.0
  %204 = vmatpush1.msra.mxu0 %v177
  %205 = vmatprep.subr.mxu0 0.0
  %206 = vmatpush1.msra.mxu0 %v178
  %207 = vmatprep.subr.mxu0 0.0
  %208 = vmatpush1.msra.mxu0 %v179
  %209 = vmatprep.subr.mxu0 0.0
  %210 = vmatpush1.msra.mxu0 %v180
  %211 = vmatprep.subr.mxu0 0.0
  %212 = vmatpush1.msra.mxu0 %v181
  %213 = vmatprep.subr.mxu0 0.0
  %214 = vmatpush1.msra.mxu0 %v182
  %215 = vmatprep.subr.mxu0 0.0
  %216 = vmatpush1.msra.mxu0 %v183
  %217 = vmatprep.subr.mxu0 0.0
  %218 = vmatpush1.msra.mxu0 %v184
  %219 = vmatprep.subr.mxu0 0.0
  %220 = vmatpush1.msra.mxu0 %v185
  %221 = vmatprep.subr.mxu0 0.0
  %222 = vmatpush1.msra.mxu0 %v186
  %223 = vmatprep.subr.mxu0 0.0
  %224 = vmatpush1.msra.mxu0 %v187
  %225 = vmatprep.subr.mxu0 0.0
  %226 = vmatpush1.msra.mxu0 %v188
  %227 = vmatprep.subr.mxu0 0.0
  %228 = vmatpush1.msra.mxu0 %v189
  %229 = vmatprep.subr.mxu0 0.0
  %230 = vmatpush1.msra.mxu0 0.0
  %231 = vmatprep.subr.mxu0 0.0
  %232 = vmatpush1.msra.mxu0 0.0
  %233 = vmatprep.subr.mxu0 0.0
  %234 = vmatpush1.msra.mxu0 0.0
  %235 = vmatprep.subr.mxu0 0.0
  %236 = vmatpush1.msra.mxu0 0.0
  %237 = vmatprep.subr.mxu0 0.0
  %238 = vmatpush1.msra.mxu0 0.0
  %239 = vmatprep.subr.mxu0 0.0
  %240 = vmatpush1.msra.mxu0 0.0
  %241 = vmatprep.subr.mxu0 0.0
  %242 = vmatpush1.msra.mxu0 0.0
  %243 = vmatprep.subr.mxu0 0.0
  %244 = vmatpush1.msra.mxu0 0.0
  %245 = vmatprep.subr.mxu0 0.0
  %246 = vmatpush1.msra.mxu0 0.0
  %247 = vmatprep.subr.mxu0 0.0
  %248 = vmatpush1.msra.mxu0 0.0
  %249 = vmatprep.subr.mxu0 0.0
  %250 = vmatpush1.msra.mxu0 0.0
  %251 = vmatprep.subr.mxu0 0.0
  %252 = vmatpush1.msra.mxu0 0.0
  %253 = vmatprep.subr.mxu0 0.0
  %254 = vmatpush1.msra.mxu0 0.0
  %255 = vmatprep.subr.mxu0 0.0
  %256 = vmatpush1.msra.mxu0 0.0
  %257 = vmatprep.subr.mxu0 0.0
  %258 = vmatpush1.msra.mxu0 0.0
  %259 = vmatprep.subr.mxu0 0.0
  %260 = vmatpush1.msra.mxu0 0.0
  %261 = vmatprep.mubr.f32.mxu0 0.0
  %262 = vmatmul.mubr.f32.gmra.mrb[0].mxu0 %v172
  %v263 = vpop.f32.mrb[0].mxu0
  %v264 = vadd.f32 %v195, %v263
  %v265 = vpop.f32.mrb[0].mxu0
  %266 = vmatprep.mubr.f32.mxu0 0.0
  %267 = vmatmul.mubr.f32.gmra.mrb[0].mxu0 %v173
  %v268 = vpop.f32.mrb[0].mxu0
  %v269 = vadd.f32 %v195, %v268
  %v270 = vpop.f32.mrb[0].mxu0
  %271 = vdwg.mxu0
  %vm272 = vcmask 7168
  %273 = vst.msk [vmem:[%s7] sm:$0xff] %vm272, %v264
  %274 = vst.msk [vmem:[%s7 + $0x8] sm:$0xff] %vm272, %v269
  // Predicated region
  $region30: #{tpu_custom_call.1} parent=0 // pred_check
    _
  $region31: #{tpu_custom_call.1} parent=0 // pred_check_branch
    %276 = sbr.rel (0) target = $region33
  $region32: #{tpu_custom_call.1} parent=0 // pred_region
    _
  $region33: #{tpu_custom_call.1} parent=0 // pred_fallthru
    _
  // Predicated region
  $region34: #{tpu_custom_call.1} parent=0 // pred_check
    _
  $region35: #{tpu_custom_call.1} parent=0 // pred_check_branch
    %278 = sbr.rel (0) target = $region37
  $region36: #{tpu_custom_call.1} parent=0 // pred_region
    _
  $region37: #{tpu_custom_call.1} parent=0 // pred_fallthru
    _

</llo_original>
